<compile_context>
chip_gen: v7x
topology: tpu7x:2x2x1
jax: 0.10.0
libtpu: 0.0.40
codegen_flags: <defaults>
</compile_context>

<pallas_src>
import functools

import jax
import jax.numpy as jnp
from jax.experimental import pallas as pl
from jax.experimental.pallas import tpu as pltpu

LANE = 128


def _round_up(x, m):
    return ((x + m - 1) // m) * m


def _cdiv(a, b):
    return -(-a // b)


# ---------------------------------------------------------------------------
# Kernels
# ---------------------------------------------------------------------------
def _mlp_tail(h1, w2_ref, b2_ref, w3_ref, b3_ref, o_ref):
    """Shared ReLU -> Linear -> ReLU -> Linear epilogue (f32 accumulation)."""
    h1 = jnp.maximum(h1, 0.0)
    h2 = jnp.dot(h1.astype(w2_ref.dtype), w2_ref[...],
                 preferred_element_type=jnp.float32)
    h2 = jnp.maximum(h2 + b2_ref[...], 0.0)
    out = jnp.dot(h2.astype(w3_ref.dtype), w3_ref[...],
                  preferred_element_type=jnp.float32) + b3_ref[...]
    o_ref[...] = out.astype(o_ref.dtype)


def _mlp_kernel_onehot(feat_ref, gid_ref, g_ref, w1f_ref, w2_ref, b2_ref,
                       w3_ref, b3_ref, o_ref):
    """Small-G path: per-graph layer-1 term gathered with a one-hot MXU matmul."""
    feat = feat_ref[...]                     # (tm, message_size)
    gid = gid_ref[...]                       # (tm, 1) int32 graph index per node
    g = g_ref[...]                           # (G_pad, H_pad) f32 = emb @ W1_emb + b1
    tm, g_pad = feat.shape[0], g.shape[0]

    onehot = jax.lax.broadcasted_iota(jnp.int32, (tm, g_pad), 1) == gid
    glob_h = jnp.dot(onehot.astype(jnp.float32), g,
                     preferred_element_type=jnp.float32)          # (tm, H_pad)

    h1 = jnp.dot(feat.astype(w1f_ref.dtype), w1f_ref[...],
                 preferred_element_type=jnp.float32) + glob_h
    _mlp_tail(h1, w2_ref, b2_ref, w3_ref, b3_ref, o_ref)


def _mlp_kernel_gathered(feat_ref, glob_ref, w1f_ref, w2_ref, b2_ref,
                         w3_ref, b3_ref, o_ref):
    """Large-G path: glob_h = (emb @ W1_emb + b1)[gid] pre-gathered in XLA and streamed."""
    h1 = jnp.dot(feat_ref[...].astype(w1f_ref.dtype), w1f_ref[...],
                 preferred_element_type=jnp.float32) + glob_ref[...]
    _mlp_tail(h1, w2_ref, b2_ref, w3_ref, b3_ref, o_ref)


# ---------------------------------------------------------------------------
# pallas_call plumbing
# ---------------------------------------------------------------------------
def _resident_spec(shape):
    """Constant-index resident block: single-buffer it to halve its VMEM footprint."""
    if hasattr(pl, "Buffered"):
        try:
            return pl.BlockSpec(shape, lambda i: (0, 0), pipeline_mode=pl.Buffered(1))
        except TypeError:
            pass
    return pl.BlockSpec(shape, lambda i: (0, 0))


def _physical_vmem_bytes():
    try:
        return int(pltpu.get_tpu_info().vmem_capacity_bytes)
    except Exception:
        return 64 << 20   # smallest physical VMEM among targets (v7x, per TC)


def _vmem_limit(streamed_per_tile, resident, intermediates):
    # streamed blocks are double-buffered by the pipeline; resident blocks single-buffered.
    est = 2 * streamed_per_tile + resident + intermediates
    want = int(est * 1.25) + (2 << 20)
    phys = _physical_vmem_bytes()
    # Always pass an explicit limit (v5e default scoped limit is only 16 MiB), floored at
    # 32 MiB and clamped below physical VMEM so the override itself can't fail compilation.
    return int(min(max(want, 32 << 20), phys - (4 << 20)))


@functools.partial(jax.jit, static_argnames=("tm",))
def _mlp_pallas_onehot(feat, gid, g, w1f, w2, b2, w3, b3, *, tm):
    n_pad, msg = feat.shape
    g_pad, h_pad = g.shape
    out_dim = w3.shape[1]
    f_item = feat.dtype.itemsize
    w_item = w2.dtype.itemsize

    streamed = tm * (msg * f_item + 4 + out_dim * f_item)
    resident = (g_pad * h_pad * 4
                + msg * h_pad * w_item
                + h_pad * h_pad * w_item + h_pad * 4
                + h_pad * out_dim * w_item + out_dim * 4)
    intermed = tm * (3 * h_pad + 2 * g_pad) * 4        # h1, h2, glob_h, iota+onehot
    vmem = _vmem_limit(streamed, resident, intermed)

    return pl.pallas_call(
        _mlp_kernel_onehot,
        out_shape=jax.ShapeDtypeStruct((n_pad, out_dim), feat.dtype),
        grid=(n_pad // tm,),
        in_specs=[
            pl.BlockSpec((tm, msg), lambda i: (i, 0)),   # feature tile       (streamed)
            pl.BlockSpec((tm, 1), lambda i: (i, 0)),     # per-node graph id  (streamed)
            _resident_spec((g_pad, h_pad)),              # per-graph W1_emb@emb + b1 table
            _resident_spec((msg, h_pad)),                # W1_feat
            _resident_spec((h_pad, h_pad)),              # W2
            _resident_spec((1, h_pad)),                  # b2
            _resident_spec((h_pad, out_dim)),            # W3 (true output width)
            _resident_spec((1, out_dim)),                # b3
        ],
        out_specs=pl.BlockSpec((tm, out_dim), lambda i: (i, 0)),
        compiler_params=pltpu.CompilerParams(
            dimension_semantics=("parallel",),
            vmem_limit_bytes=vmem,
        ),
    )(feat, gid, g, w1f, w2, b2, w3, b3)


@functools.partial(jax.jit, static_argnames=("tm",))
def _mlp_pallas_gathered(feat, glob_h, w1f, w2, b2, w3, b3, *, tm):
    n_pad, msg = feat.shape
    h_pad = glob_h.shape[1]
    out_dim = w3.shape[1]
    f_item = feat.dtype.itemsize
    w_item = w2.dtype.itemsize

    streamed = tm * (msg * f_item + h_pad * 4 + out_dim * f_item)
    resident = (msg * h_pad * w_item
                + h_pad * h_pad * w_item + h_pad * 4
                + h_pad * out_dim * w_item + out_dim * 4)
    intermed = tm * 2 * h_pad * 4                       # h1, h2
    vmem = _vmem_limit(streamed, resident, intermed)

    return pl.pallas_call(
        _mlp_kernel_gathered,
        out_shape=jax.ShapeDtypeStruct((n_pad, out_dim), feat.dtype),
        grid=(n_pad // tm,),
        in_specs=[
            pl.BlockSpec((tm, msg), lambda i: (i, 0)),   # feature tile        (streamed)
            pl.BlockSpec((tm, h_pad), lambda i: (i, 0)), # pre-gathered glob_h (streamed)
            _resident_spec((msg, h_pad)),                # W1_feat
            _resident_spec((h_pad, h_pad)),              # W2
            _resident_spec((1, h_pad)),                  # b2
            _resident_spec((h_pad, out_dim)),            # W3
            _resident_spec((1, out_dim)),                # b3
        ],
        out_specs=pl.BlockSpec((tm, out_dim), lambda i: (i, 0)),
        compiler_params=pltpu.CompilerParams(
            dimension_semantics=("parallel",),
            vmem_limit_bytes=vmem,
        ),
    )(feat, glob_h, w1f, w2, b2, w3, b3)


# ---------------------------------------------------------------------------
# Parameters
# ---------------------------------------------------------------------------
def init_params(key, message_size, embedding_size, hidden_size, output_size,
                dtype=jnp.float32):
    """Unpadded, PyTorch-Linear-style parameters; weights stored (in_features, out_features)."""
    in_dim = message_size + embedding_size
    ks = jax.random.split(key, 6)

    def lin(kw, kb, fan_in, fan_out):
        bound = 1.0 / jnp.sqrt(fan_in)
        w = jax.random.uniform(kw, (fan_in, fan_out), dtype, -bound, bound)
        b = jax.random.uniform(kb, (1, fan_out), dtype, -bound, bound)
        return w, b

    w1, b1 = lin(ks[0], ks[1], in_dim, hidden_size)
    w2, b2 = lin(ks[2], ks[3], hidden_size, hidden_size)
    w3, b3 = lin(ks[4], ks[5], hidden_size, output_size)
    return {"w1": w1, "b1": b1, "w2": w2, "b2": b2, "w3": w3, "b3": b3,
            "message_size": message_size, "embedding_size": embedding_size,
            "output_size": output_size}


def pad_params(params, weight_dtype=None):
    """Split W1 into feature/embedding halves, zero-pad the hidden dim to 128 lanes (exact:
    ReLU(0)=0, padded rows/cols contribute nothing), keep the output dim at its true width.
    Biases stay f32 (the kernel epilogue runs in f32). `weight_dtype=jnp.bfloat16` halves the
    resident-weight VMEM and takes the fast MXU path (recommended for large hidden on v7x)."""
    msg = params["message_size"]
    hidden = params["w1"].shape[1]
    out = params["w3"].shape[1]
    h_pad = _round_up(hidden, LANE)

    def cast(x):
        return x.astype(weight_dtype) if weight_dtype is not None else x

    def padc(x, cols):  # pad columns (lane dim)
        return jnp.pad(x, ((0, 0), (0, cols - x.shape[1])))

    w1 = params["w1"]
    return {
        "w1_feat": cast(padc(w1[:msg], h_pad)),
        "w1_emb": cast(padc(w1[msg:], h_pad)),
        "b1": padc(params["b1"].astype(jnp.float32), h_pad),
        "w2": cast(jnp.pad(params["w2"], ((0, h_pad - hidden), (0, h_pad - hidden)))),
        "b2": padc(params["b2"].astype(jnp.float32), h_pad),
        "w3": cast(jnp.pad(params["w3"], ((0, h_pad - hidden), (0, 0)))),
        "b3": params["b3"].astype(jnp.float32),
        "output_size": out,
    }


# ---------------------------------------------------------------------------
# Forward
# ---------------------------------------------------------------------------
def partial_logit_network_forward(feature, graph_embedding, scope, padded_params,
                                  *, tm_max=1024, onehot_max_graphs=256):
    """feature: (N, message_size); graph_embedding: (G, embedding_size);
    scope: (G,) int node counts per graph (sum must equal N — jnp.repeat with
    total_repeat_length silently truncates/pads otherwise)."""
    n = feature.shape[0]
    out_dim = padded_params["output_size"]
    if n == 0:
        # Matches torch: feature.new_zeros([output_size])
        return jnp.zeros([out_dim], feature.dtype)

    p = padded_params
    num_graphs = graph_embedding.shape[0]

    # Per-graph layer-1 global term with b1 folded in: g[gi] = emb[gi] @ W1_emb + b1 (tiny).
    g = jnp.dot(graph_embedding.astype(p["w1_emb"].dtype), p["w1_emb"],
                preferred_element_type=jnp.float32) + p["b1"]

    # Per-node graph index (replaces repeat_interleave of the embedding itself).
    node_gid = jnp.repeat(jnp.arange(num_graphs, dtype=jnp.int32), scope,
                          total_repeat_length=n)

    # Adaptive row tiling: padding waste < one row-align per tile, and >= 2 grid steps for
    # mid/large N so the "parallel" axis can shard across v7x's two TensorCores.
    row_align = 16 if feature.dtype == jnp.bfloat16 else 8
    n_tiles = max(_cdiv(n, tm_max), 2 if n >= 2 * LANE else 1)
    tm = _round_up(_cdiv(n, n_tiles), row_align)
    n_pad = _round_up(n, tm)
    if n_pad != n:
        feature = jnp.pad(feature, ((0, n_pad - n), (0, 0)))
        node_gid = jnp.pad(node_gid, (0, n_pad - n))   # padded rows -> graph 0, sliced off

    if num_graphs <= onehot_max_graphs:
        g_pad = _round_up(num_graphs, 8)
        if g_pad != num_graphs:
            g = jnp.pad(g, ((0, g_pad - num_graphs), (0, 0)))
        out = _mlp_pallas_onehot(feature, node_gid[:, None], g,
                                 p["w1_feat"], p["w2"], p["b2"], p["w3"], p["b3"],
                                 tm=tm)
    else:
        # Large graph batch: gather per-node glob_h in XLA and stream it; keeps the in-kernel
        # cost O(tm*h_pad) instead of O(tm*G*h_pad) and avoids a (tm, G) one-hot intermediate.
        glob_h = jnp.take(g, node_gid, axis=0)
        out = _mlp_pallas_gathered(feature, glob_h,
                                   p["w1_feat"], p["w2"], p["b2"], p["w3"], p["b3"],
                                   tm=tm)
    return out[:n] if n_pad != n else out


# ---------------------------------------------------------------------------
# Pure-JAX reference (unpadded params)
# ---------------------------------------------------------------------------
def _reference(feature, graph_embedding, scope, params):
    n = feature.shape[0]
    glob = jnp.repeat(graph_embedding, scope, axis=0, total_repeat_length=n)
    x = jnp.concatenate([feature, glob], axis=1)
    h = jnp.maximum(x @ params["w1"] + params["b1"], 0.0)
    h = jnp.maximum(h @ params["w2"] + params["b2"], 0.0)
    return h @ params["w3"] + params["b3"]


if __name__ == "__main__":
    key = jax.random.PRNGKey(0)

    # Small shapes consistent with the module's forward:
    message_size = 16
    embedding_size = 16
    hidden_size = 32
    output_size = 8

    k_feat, k_emb, k_par, k_feat2, k_emb2 = jax.random.split(key, 5)
    params = init_params(k_par, message_size, embedding_size, hidden_size, output_size)
    kparams = pad_params(params)

    # --- case 1: tiny graph batch (2 graphs, 8 nodes), single-tile grid ---
    scope = jnp.array([3, 5], dtype=jnp.int32)
    n_nodes = 8
    feature = jax.random.normal(k_feat, (n_nodes, message_size), jnp.float32)
    graph_embedding = jax.random.normal(k_emb, (2, embedding_size), jnp.float32)

    out = partial_logit_network_forward(feature, graph_embedding, scope, kparams)
    out = jax.block_until_ready(out)
    ref = _reference(feature, graph_embedding, scope, params)
    assert out.shape == (n_nodes, output_size)
    assert jnp.allclose(out, ref, atol=1e-3, rtol=1e-3), "case-1 mismatch vs reference"

    # --- case 2: larger node count -> adaptive tm (304), 2-step parallel grid ---
    scope2 = jnp.array([100, 250, 250], dtype=jnp.int32)
    n_nodes2 = 600
    feature2 = jax.random.normal(k_feat2, (n_nodes2, message_size), jnp.float32)
    graph_embedding2 = jax.random.normal(k_emb2, (3, embedding_size), jnp.float32)

    out2 = partial_logit_network_forward(feature2, graph_embedding2, scope2, kparams)
    out2 = jax.block_until_ready(out2)
    ref2 = _reference(feature2, graph_embedding2, scope2, params)
    assert out2.shape == (n_nodes2, output_size)
    assert jnp.allclose(out2, ref2, atol=1e-3, rtol=1e-3), "case-2 mismatch vs reference"

    # --- case 3: large-G streamed-gather path (forced via onehot_max_graphs=0) ---
    out2b = partial_logit_network_forward(feature2, graph_embedding2, scope2, kparams,
                                          onehot_max_graphs=0)
    out2b = jax.block_until_ready(out2b)
    assert jnp.allclose(out2b, ref2, atol=1e-3, rtol=1e-3), "case-3 mismatch vs reference"

    # --- case 4: empty-graph path (matches torch's new_zeros([output_size])) ---
    out0 = partial_logit_network_forward(
        jnp.zeros((0, message_size), jnp.float32), graph_embedding, scope, kparams)
    assert out0.shape == (output_size,)

    # TODO(synk): feature_fn / scope_fn are abstract callables in the module;
    # their outputs (`feature`, `scope`) are taken as kernel inputs here.
    print("KERNEL_OK")
</pallas_src>

<mosaic_0001>
module attributes {stable_mosaic.version = 11 : i64} {
  func.func @_mlp_kernel_onehot(%arg0: i32, %arg1: memref<8x16xf32, #tpu.memory_space<vmem>>, %arg2: memref<8x1xi32, #tpu.memory_space<vmem>>, %arg3: memref<8x128xf32, #tpu.memory_space<vmem>>, %arg4: memref<16x128xf32, #tpu.memory_space<vmem>>, %arg5: memref<128x128xf32, #tpu.memory_space<vmem>>, %arg6: memref<1x128xf32, #tpu.memory_space<vmem>>, %arg7: memref<128x8xf32, #tpu.memory_space<vmem>>, %arg8: memref<1x8xf32, #tpu.memory_space<vmem>>, %arg9: memref<8x8xf32, #tpu.memory_space<vmem>>) attributes {dimension_semantics = [#tpu.dimension_semantics<parallel>], iteration_bounds = array<i64: 1>, scalar_prefetch = 0 : i64, scratch_operands = 0 : i64, tpu.core_type = #tpu.core_type<tc>, window_params = [{transform_indices = @transform_0, window_bounds = array<i64: 8, 16>}, {transform_indices = @transform_1, window_bounds = array<i64: 8, 1>}, {pipeline_mode = #tpu.pipeline_mode<synchronous>, transform_indices = @transform_2, window_bounds = array<i64: 8, 128>}, {pipeline_mode = #tpu.pipeline_mode<synchronous>, transform_indices = @transform_3, window_bounds = array<i64: 16, 128>}, {pipeline_mode = #tpu.pipeline_mode<synchronous>, transform_indices = @transform_4, window_bounds = array<i64: 128, 128>}, {pipeline_mode = #tpu.pipeline_mode<synchronous>, transform_indices = @transform_5, window_bounds = array<i64: 1, 128>}, {pipeline_mode = #tpu.pipeline_mode<synchronous>, transform_indices = @transform_6, window_bounds = array<i64: 128, 8>}, {pipeline_mode = #tpu.pipeline_mode<synchronous>, transform_indices = @transform_7, window_bounds = array<i64: 1, 8>}, {transform_indices = @transform_8, window_bounds = array<i64: 8, 8>}]} {
    %c0 = arith.constant 0 : index
    %c0_0 = arith.constant 0 : index
    %0 = vector.load %arg1[%c0, %c0_0] : memref<8x16xf32, #tpu.memory_space<vmem>>, vector<8x16xf32>
    %c0_1 = arith.constant 0 : index
    %c0_2 = arith.constant 0 : index
    %1 = vector.load %arg2[%c0_1, %c0_2] : memref<8x1xi32, #tpu.memory_space<vmem>>, vector<8x1xi32>
    %c0_3 = arith.constant 0 : index
    %c0_4 = arith.constant 0 : index
    %2 = vector.load %arg3[%c0_3, %c0_4] : memref<8x128xf32, #tpu.memory_space<vmem>>, vector<8x128xf32>
    %3 = tpu.iota {dimensions = array<i32: 1>} : vector<8x8xi32>
    %4 = vector.broadcast %1 : vector<8x1xi32> to vector<8x8xi32>
    %5 = arith.cmpi eq, %3, %4 : vector<8x8xi32>
    %6 = arith.extui %5 : vector<8x8xi1> to vector<8x8xi32>
    %7 = arith.sitofp %6 : vector<8x8xi32> to vector<8x8xf32>
    %cst = arith.constant dense<0.000000e+00> : vector<8x128xf32>
    %8 = tpu.matmul %7, %2, %cst {dimension_numbers = #tpu.dot_dimension_numbers<[1], [0], [0], [1], [0, 0, 1, 1], [], []>} : vector<8x8xf32>, vector<8x128xf32>, vector<8x128xf32> -> vector<8x128xf32>
    %c0_5 = arith.constant 0 : index
    %c0_6 = arith.constant 0 : index
    %9 = vector.load %arg4[%c0_5, %c0_6] : memref<16x128xf32, #tpu.memory_space<vmem>>, vector<16x128xf32>
    %cst_7 = arith.constant dense<0.000000e+00> : vector<8x128xf32>
    %10 = tpu.matmul %0, %9, %cst_7 {dimension_numbers = #tpu.dot_dimension_numbers<[1], [0], [0], [1], [0, 0, 1, 1], [], []>} : vector<8x16xf32>, vector<16x128xf32>, vector<8x128xf32> -> vector<8x128xf32>
    %11 = arith.addf %10, %8 : vector<8x128xf32>
    %cst_8 = arith.constant 0.000000e+00 : f32
    %12 = vector.broadcast %cst_8 : f32 to vector<8x128xf32>
    %13 = arith.maximumf %11, %12 : vector<8x128xf32>
    %c0_9 = arith.constant 0 : index
    %c0_10 = arith.constant 0 : index
    %14 = vector.load %arg5[%c0_9, %c0_10] : memref<128x128xf32, #tpu.memory_space<vmem>>, vector<128x128xf32>
    %cst_11 = arith.constant dense<0.000000e+00> : vector<8x128xf32>
    %15 = tpu.matmul %13, %14, %cst_11 {dimension_numbers = #tpu.dot_dimension_numbers<[1], [0], [0], [1], [0, 0, 1, 1], [], []>} : vector<8x128xf32>, vector<128x128xf32>, vector<8x128xf32> -> vector<8x128xf32>
    %c0_12 = arith.constant 0 : index
    %c0_13 = arith.constant 0 : index
    %16 = vector.load %arg6[%c0_12, %c0_13] : memref<1x128xf32, #tpu.memory_space<vmem>>, vector<1x128xf32>
    %17 = vector.broadcast %16 : vector<1x128xf32> to vector<8x128xf32>
    %18 = arith.addf %15, %17 : vector<8x128xf32>
    %cst_14 = arith.constant 0.000000e+00 : f32
    %19 = vector.broadcast %cst_14 : f32 to vector<8x128xf32>
    %20 = arith.maximumf %18, %19 : vector<8x128xf32>
    %c0_15 = arith.constant 0 : index
    %c0_16 = arith.constant 0 : index
    %21 = vector.load %arg7[%c0_15, %c0_16] : memref<128x8xf32, #tpu.memory_space<vmem>>, vector<128x8xf32>
    %cst_17 = arith.constant dense<0.000000e+00> : vector<8x8xf32>
    %22 = tpu.matmul %20, %21, %cst_17 {dimension_numbers = #tpu.dot_dimension_numbers<[1], [0], [0], [1], [0, 0, 1, 1], [], []>} : vector<8x128xf32>, vector<128x8xf32>, vector<8x8xf32> -> vector<8x8xf32>
    %c0_18 = arith.constant 0 : index
    %c0_19 = arith.constant 0 : index
    %23 = vector.load %arg8[%c0_18, %c0_19] : memref<1x8xf32, #tpu.memory_space<vmem>>, vector<1x8xf32>
    %24 = vector.broadcast %23 : vector<1x8xf32> to vector<8x8xf32>
    %25 = arith.addf %22, %24 : vector<8x8xf32>
    %c0_20 = arith.constant 0 : index
    %c0_21 = arith.constant 0 : index
    %26 = vector.load %arg9[%c0_20, %c0_21] : memref<8x8xf32, #tpu.memory_space<vmem>>, vector<8x8xf32>
    tpu.vector_store %arg9[%c0_20, %c0_21], %25 {strides = array<i32>} : memref<8x8xf32, #tpu.memory_space<vmem>>, vector<8x8xf32>,
    return
  }
  func.func @transform_0(%arg0: i32) -> (i32, i32) {
    %c0_i32 = arith.constant 0 : i32
    %c0_i32_0 = arith.constant 0 : i32
    return %arg0, %c0_i32 : i32, i32
  }
  func.func @transform_1(%arg0: i32) -> (i32, i32) {
    %c0_i32 = arith.constant 0 : i32
    %c0_i32_0 = arith.constant 0 : i32
    return %arg0, %c0_i32 : i32, i32
  }
  func.func @transform_2(%arg0: i32) -> (i32, i32) {
    %c0_i32 = arith.constant 0 : i32
    %c0_i32_0 = arith.constant 0 : i32
    %c0_i32_1 = arith.constant 0 : i32
    return %c0_i32, %c0_i32_0 : i32, i32
  }
  func.func @transform_3(%arg0: i32) -> (i32, i32) {
    %c0_i32 = arith.constant 0 : i32
    %c0_i32_0 = arith.constant 0 : i32
    %c0_i32_1 = arith.constant 0 : i32
    return %c0_i32, %c0_i32_0 : i32, i32
  }
  func.func @transform_4(%arg0: i32) -> (i32, i32) {
    %c0_i32 = arith.constant 0 : i32
    %c0_i32_0 = arith.constant 0 : i32
    %c0_i32_1 = arith.constant 0 : i32
    return %c0_i32, %c0_i32_0 : i32, i32
  }
  func.func @transform_5(%arg0: i32) -> (i32, i32) {
    %c0_i32 = arith.constant 0 : i32
    %c0_i32_0 = arith.constant 0 : i32
    %c0_i32_1 = arith.constant 0 : i32
    return %c0_i32, %c0_i32_0 : i32, i32
  }
  func.func @transform_6(%arg0: i32) -> (i32, i32) {
    %c0_i32 = arith.constant 0 : i32
    %c0_i32_0 = arith.constant 0 : i32
    %c0_i32_1 = arith.constant 0 : i32
    return %c0_i32, %c0_i32_0 : i32, i32
  }
  func.func @transform_7(%arg0: i32) -> (i32, i32) {
    %c0_i32 = arith.constant 0 : i32
    %c0_i32_0 = arith.constant 0 : i32
    %c0_i32_1 = arith.constant 0 : i32
    return %c0_i32, %c0_i32_0 : i32, i32
  }
  func.func @transform_8(%arg0: i32) -> (i32, i32) {
    %c0_i32 = arith.constant 0 : i32
    %c0_i32_0 = arith.constant 0 : i32
    return %arg0, %c0_i32 : i32, i32
  }
}

</mosaic_0001>

<llo_original>
// kernel: _mlp_pallas_onehot.1
$region0: #{_mlp_pallas_onehot.1}
  #allocation0 [shape = 'u32[]', space=smem, size = 0x4, offset = 0x4, fixed_abs, tag = 'smem constant byte address 0x4 - core index']
  #allocation1 [shape = 'u32[144,128]{1,0:T(1,128)}', space=vmem, size = 0x12000, scoped, tag = 'internal scratch']
  %s0 = inlined_call_operand.vmem [shape: f32[8,16], index: 0, kind: input, shape index: {}]
  %s1 = inlined_call_operand.vmem [shape: s32[8,1], index: 1, kind: input, shape index: {}]
  %s2 = inlined_call_operand.hbm [shape: f32[8,128], index: 2, kind: input, shape index: {}]
  %s3 = inlined_call_operand.vmem [shape: f32[16,128], index: 3, kind: input, shape index: {}]
  %s4 = inlined_call_operand.vmem [shape: f32[128,128], index: 4, kind: input, shape index: {}]
  %s5 = inlined_call_operand.vmem [shape: f32[1,128], index: 5, kind: input, shape index: {}]
  %s6 = inlined_call_operand.vmem [shape: f32[128,8], index: 6, kind: input, shape index: {}]
  %s7 = inlined_call_operand.vmem [shape: f32[1,8], index: 7, kind: input, shape index: {}]
  %s8 = inlined_call_operand.hbm [shape: f32[8,8], index: 8, kind: output, shape index: {}]
  %s9 = sld [smem:[#allocation0]]
  $region46: #{_mlp_pallas_onehot.1} parent=0
    _
  %s11 = ssub.s32 1, %s9
  %s12 = scalar_select 0, %s11, %s9
  $region1: #{_mlp_pallas_onehot.1} parent=0
    #allocation2 [shape = 'u8[4096]{0}', space=vmem, size = 0x1000, scoped, tag = 'input window, operand 2, single buffered']
    #allocation3 [shape = 's32[1]{0}', space=sflag, size = 0x4, scoped, tag = 'scoped memory for _mlp_pallas_onehot.1']
    #allocation4 [shape = 's32[1]{0}', space=sflag, size = 0x4, scoped, tag = 'scoped memory for _mlp_pallas_onehot.1']
    #allocation5 [shape = 'u8[4096]{0}', space=vmem, size = 0x1000, scoped, tag = 'output window, operand 0, single buffered']
    %13 = vsyncpa [#allocation3], 0
    %14 = vsyncpa [#allocation4], 0
    // Predicated region
    $region2: #{_mlp_pallas_onehot.1} parent=1 // pred_check
      _
    $region3: #{_mlp_pallas_onehot.1} parent=1 // pred_check_branch
      %16 = sbr.rel (0) target = $region5
    $region4: #{_mlp_pallas_onehot.1} parent=1 // pred_region
      _
    $region5: #{_mlp_pallas_onehot.1} parent=1 // pred_fallthru
      _
    // Predicated region
    $region6: #{_mlp_pallas_onehot.1} parent=1 // pred_check
      _
    $region7: #{_mlp_pallas_onehot.1} parent=1 // pred_check_branch
      %18 = sbr.rel (0) target = $region9
    $region8: #{_mlp_pallas_onehot.1} parent=1 // pred_region
      _
    $region9: #{_mlp_pallas_onehot.1} parent=1 // pred_fallthru
      _
    // Predicated region
    $region10: #{_mlp_pallas_onehot.1} parent=1 // pred_check
      _
    $region11: #{_mlp_pallas_onehot.1} parent=1 // pred_check_branch
      %20 = sbr.rel (0) target = $region13
    $region12: #{_mlp_pallas_onehot.1} parent=1 // pred_region
      %s22 = ssub.s32 128, 128
      %23 = vsyncadd [#allocation3], %s22
      %s25 = sshll.u32 [#allocation2], 4
      %s26 = int_to_ptr.vmem [resolvable:$true] %s25
      %28 = dma.hbm_to_vmem [thread:$0]  %s2, 128, %s26, [#allocation3]
    $region13: #{_mlp_pallas_onehot.1} parent=1 // pred_fallthru
      _
    // Predicated region
    $region14: #{_mlp_pallas_onehot.1} parent=1 // pred_check
      _
    $region15: #{_mlp_pallas_onehot.1} parent=1 // pred_check_branch
      %30 = sbr.rel (0) target = $region17
    $region16: #{_mlp_pallas_onehot.1} parent=1 // pred_region
      _
    $region17: #{_mlp_pallas_onehot.1} parent=1 // pred_fallthru
      _
    // Predicated region
    $region18: #{_mlp_pallas_onehot.1} parent=1 // pred_check
      _
    $region19: #{_mlp_pallas_onehot.1} parent=1 // pred_check_branch
      %32 = sbr.rel (0) target = $region21
    $region20: #{_mlp_pallas_onehot.1} parent=1 // pred_region
      _
    $region21: #{_mlp_pallas_onehot.1} parent=1 // pred_fallthru
      _
    // Predicated region
    $region22: #{_mlp_pallas_onehot.1} parent=1 // pred_check
      _
    $region23: #{_mlp_pallas_onehot.1} parent=1 // pred_check_branch
      %34 = sbr.rel (0) target = $region25
    $region24: #{_mlp_pallas_onehot.1} parent=1 // pred_region
      _
    $region25: #{_mlp_pallas_onehot.1} parent=1 // pred_fallthru
      _
    // Predicated region
    $region26: #{_mlp_pallas_onehot.1} parent=1 // pred_check
      _
    $region27: #{_mlp_pallas_onehot.1} parent=1 // pred_check_branch
      %36 = sbr.rel (0) target = $region29
    $region28: #{_mlp_pallas_onehot.1} parent=1 // pred_region
      _
    $region29: #{_mlp_pallas_onehot.1} parent=1 // pred_fallthru
      _
    // Predicated region
    $region30: #{_mlp_pallas_onehot.1} parent=1 // pred_check
      _
    $region31: #{_mlp_pallas_onehot.1} parent=1 // pred_check_branch
      %38 = sbr.rel (0) target = $region33
    $region32: #{_mlp_pallas_onehot.1} parent=1 // pred_region
      _
    $region33: #{_mlp_pallas_onehot.1} parent=1 // pred_fallthru
      _
    // Predicated region
    $region34: #{_mlp_pallas_onehot.1} parent=1 // pred_check
      _
    $region35: #{_mlp_pallas_onehot.1} parent=1 // pred_check_branch
      %40 = sbr.rel (0) target = $region37
    $region36: #{_mlp_pallas_onehot.1} parent=1 // pred_region
      %41 = dma.done [#allocation3], 128
    $region37: #{_mlp_pallas_onehot.1} parent=1 // pred_fallthru
      _
    %v42 = vld [vmem:[%s0] sm:$0xff]
    %v43 = vld [vmem:[%s1] sm:$0xff]
    %v44 = vld [vmem:[#allocation2] sm:$0xff]
    %v45 = vlaneseq
    %v46 = vand.u32 %v45, 127
    %47 = vset.pattern.permute.xlu0 0
    %48 = vperm.xlu0 %47, %v43
    %v49 = vpop.permute.xlu0 %48
    %vm50 = vcmp.eq.s32.totalorder %v46, %v49
    %v51 = vsel %vm50, 1, 0
    %v52 = vcvt.s32.f32 %v51
    %vm53 = vcmask 64512
    %v55 = vsel %vm53, %v52, 0
    %57 = vmatprep.subr.mxu0 0.0
    %58 = vmatpush1.msra.mxu0 %v44
    %59 = vmatprep.subr.mxu0 0.0
    %60 = vmatpush1.msra.mxu0 0.0
    %61 = vmatprep.subr.mxu0 0.0
    %62 = vmatpush1.msra.mxu0 0.0
    %63 = vmatprep.subr.mxu0 0.0
    %64 = vmatpush1.msra.mxu0 0.0
    %65 = vmatprep.subr.mxu0 0.0
    %66 = vmatpush1.msra.mxu0 0.0
    %67 = vmatprep.subr.mxu0 0.0
    %68 = vmatpush1.msra.mxu0 0.0
    %69 = vmatprep.subr.mxu0 0.0
    %70 = vmatpush1.msra.mxu0 0.0
    %71 = vmatprep.subr.mxu0 0.0
    %72 = vmatpush1.msra.mxu0 0.0
    %73 = vmatprep.subr.mxu0 0.0
    %74 = vmatpush1.msra.mxu0 0.0
    %75 = vmatprep.subr.mxu0 0.0
    %76 = vmatpush1.msra.mxu0 0.0
    %77 = vmatprep.subr.mxu0 0.0
    %78 = vmatpush1.msra.mxu0 0.0
    %79 = vmatprep.subr.mxu0 0.0
    %80 = vmatpush1.msra.mxu0 0.0
    %81 = vmatprep.subr.mxu0 0.0
    %82 = vmatpush1.msra.mxu0 0.0
    %83 = vmatprep.subr.mxu0 0.0
    %84 = vmatpush1.msra.mxu0 0.0
    %85 = vmatprep.subr.mxu0 0.0
    %86 = vmatpush1.msra.mxu0 0.0
    %87 = vmatprep.subr.mxu0 0.0
    %88 = vmatpush1.msra.mxu0 0.0
    %89 = vmatprep.subr.mxu0 0.0
    %90 = vmatpush1.msra.mxu0 0.0
    %91 = vmatprep.subr.mxu0 0.0
    %92 = vmatpush1.msra.mxu0 0.0
    %93 = vmatprep.subr.mxu0 0.0
    %94 = vmatpush1.msra.mxu0 0.0
    %95 = vmatprep.subr.mxu0 0.0
    %96 = vmatpush1.msra.mxu0 0.0
    %97 = vmatprep.subr.mxu0 0.0
    %98 = vmatpush1.msra.mxu0 0.0
    %99 = vmatprep.subr.mxu0 0.0
    %100 = vmatpush1.msra.mxu0 0.0
    %101 = vmatprep.subr.mxu0 0.0
    %102 = vmatpush1.msra.mxu0 0.0
    %103 = vmatprep.subr.mxu0 0.0
    %104 = vmatpush1.msra.mxu0 0.0
    %105 = vmatprep.subr.mxu0 0.0
    %106 = vmatpush1.msra.mxu0 0.0
    %107 = vmatprep.subr.mxu0 0.0
    %108 = vmatpush1.msra.mxu0 0.0
    %109 = vmatprep.subr.mxu0 0.0
    %110 = vmatpush1.msra.mxu0 0.0
    %111 = vmatprep.subr.mxu0 0.0
    %112 = vmatpush1.msra.mxu0 0.0
    %113 = vmatprep.subr.mxu0 0.0
    %114 = vmatpush1.msra.mxu0 0.0
    %115 = vmatprep.subr.mxu0 0.0
    %116 = vmatpush1.msra.mxu0 0.0
    %117 = vmatprep.subr.mxu0 0.0
    %118 = vmatpush1.msra.mxu0 0.0
    %119 = vmatprep.subr.mxu0 0.0
    %120 = vmatpush1.msra.mxu0 0.0
    %121 = vmatprep.mubr.f32.mxu0 0.0
    %122 = vmatmul.mubr.f32.gmra.mrb[0].mxu0 %v55
    %v123 = vpop.f32.mrb[0].mxu0
    %v124 = vadd.f32 0.0, %v123
    %v125 = vpop.f32.mrb[0].mxu0
    %126 = vdwg.mxu0
    %v127 = vld [vmem:[%s3] sm:$0xff]
    %v128 = vld [vmem:[%s3 + $0x8] sm:$0xff]
    %vm129 = vcmask 130048
    %v131 = vsel %vm129, %v42, 0
    %133 = vmatprep.subr.mxu0 0.0
    %134 = vmatpush1.msra.mxu0 %v127
    %135 = vmatprep.subr.mxu0 0.0
    %136 = vmatpush1.msra.mxu0 %v128
    %137 = vmatprep.subr.mxu0 0.0
    %138 = vmatpush1.msra.mxu0 0.0
    %139 = vmatprep.subr.mxu0 0.0
    %140 = vmatpush1.msra.mxu0 0.0
    %141 = vmatprep.subr.mxu0 0.0
    %142 = vmatpush1.msra.mxu0 0.0
    %143 = vmatprep.subr.mxu0 0.0
    %144 = vmatpush1.msra.mxu0 0.0
    %145 = vmatprep.subr.mxu0 0.0
    %146 = vmatpush1.msra.mxu0 0.0
    %147 = vmatprep.subr.mxu0 0.0
    %148 = vmatpush1.msra.mxu0 0.0
    %149 = vmatprep.subr.mxu0 0.0
    %150 = vmatpush1.msra.mxu0 0.0
    %151 = vmatprep.subr.mxu0 0.0
    %152 = vmatpush1.msra.mxu0 0.0
    %153 = vmatprep.subr.mxu0 0.0
    %154 = vmatpush1.msra.mxu0 0.0
    %155 = vmatprep.subr.mxu0 0.0
    %156 = vmatpush1.msra.mxu0 0.0
    %157 = vmatprep.subr.mxu0 0.0
    %158 = vmatpush1.msra.mxu0 0.0
    %159 = vmatprep.subr.mxu0 0.0
    %160 = vmatpush1.msra.mxu0 0.0
    %161 = vmatprep.subr.mxu0 0.0
    %162 = vmatpush1.msra.mxu0 0.0
    %163 = vmatprep.subr.mxu0 0.0
    %164 = vmatpush1.msra.mxu0 0.0
    %165 = vmatprep.subr.mxu0 0.0
    %166 = vmatpush1.msra.mxu0 0.0
    %167 = vmatprep.subr.mxu0 0.0
    %168 = vmatpush1.msra.mxu0 0.0
    %169 = vmatprep.subr.mxu0 0.0
    %170 = vmatpush1.msra.mxu0 0.0
    %171 = vmatprep.subr.mxu0 0.0
    %172 = vmatpush1.msra.mxu0 0.0
    %173 = vmatprep.subr.mxu0 0.0
    %174 = vmatpush1.msra.mxu0 0.0
    %175 = vmatprep.subr.mxu0 0.0
    %176 = vmatpush1.msra.mxu0 0.0
    %177 = vmatprep.subr.mxu0 0.0
    %178 = vmatpush1.msra.mxu0 0.0
    %179 = vmatprep.subr.mxu0 0.0
    %180 = vmatpush1.msra.mxu0 0.0
    %181 = vmatprep.subr.mxu0 0.0
    %182 = vmatpush1.msra.mxu0 0.0
    %183 = vmatprep.subr.mxu0 0.0
    %184 = vmatpush1.msra.mxu0 0.0
    %185 = vmatprep.subr.mxu0 0.0
    %186 = vmatpush1.msra.mxu0 0.0
    %187 = vmatprep.subr.mxu0 0.0
    %188 = vmatpush1.msra.mxu0 0.0
    %189 = vmatprep.subr.mxu0 0.0
    %190 = vmatpush1.msra.mxu0 0.0
    %191 = vmatprep.subr.mxu0 0.0
    %192 = vmatpush1.msra.mxu0 0.0
    %193 = vmatprep.subr.mxu0 0.0
    %194 = vmatpush1.msra.mxu0 0.0
    %195 = vmatprep.subr.mxu0 0.0
    %196 = vmatpush1.msra.mxu0 0.0
    %197 = vmatprep.mubr.f32.mxu0 0.0
    %198 = vmatmul.mubr.f32.gmra.mrb[0].mxu0 %v131
    %v199 = vpop.f32.mrb[0].mxu0
    %v200 = vadd.f32 %v124, %v199
    %v201 = vpop.f32.mrb[0].mxu0
    %202 = vdwg.mxu0
    %v203 = vmax.f32 %v200, 0.0
    %v204 = vld [vmem:[%s4] sm:$0xff]
    %v205 = vld [vmem:[%s4 + $0x8] sm:$0xff]
    %v206 = vld [vmem:[%s4 + $0x10] sm:$0xff]
    %v207 = vld [vmem:[%s4 + $0x18] sm:$0xff]
    %v208 = vld [vmem:[%s4 + $0x20] sm:$0xff]
    %v209 = vld [vmem:[%s4 + $0x28] sm:$0xff]
    %v210 = vld [vmem:[%s4 + $0x30] sm:$0xff]
    %v211 = vld [vmem:[%s4 + $0x38] sm:$0xff]
    %v212 = vld [vmem:[%s4 + $0x40] sm:$0xff]
    %v213 = vld [vmem:[%s4 + $0x48] sm:$0xff]
    %v214 = vld [vmem:[%s4 + $0x50] sm:$0xff]
    %v215 = vld [vmem:[%s4 + $0x58] sm:$0xff]
    %v216 = vld [vmem:[%s4 + $0x60] sm:$0xff]
    %v217 = vld [vmem:[%s4 + $0x68] sm:$0xff]
    %v218 = vld [vmem:[%s4 + $0x70] sm:$0xff]
    %v219 = vld [vmem:[%s4 + $0x78] sm:$0xff]
    %v220 = vld [vmem:[%s5] sm:$0x1]
    %v222 = vlaneseq
    %v223 = vshrl.u32 %v222, 7
    %v224 = vsub.s32 0, %v223
    %v225 = vrot.slane %v220, %v224
    %227 = vmatprep.subr.mxu0 0.0
    %228 = vmatpush1.msra.mxu0 %v204
    %229 = vmatprep.subr.mxu0 0.0
    %230 = vmatpush1.msra.mxu0 %v205
    %231 = vmatprep.subr.mxu0 0.0
    %232 = vmatpush1.msra.mxu0 %v206
    %233 = vmatprep.subr.mxu0 0.0
    %234 = vmatpush1.msra.mxu0 %v207
    %235 = vmatprep.subr.mxu0 0.0
    %236 = vmatpush1.msra.mxu0 %v208
    %237 = vmatprep.subr.mxu0 0.0
    %238 = vmatpush1.msra.mxu0 %v209
    %239 = vmatprep.subr.mxu0 0.0
    %240 = vmatpush1.msra.mxu0 %v210
    %241 = vmatprep.subr.mxu0 0.0
    %242 = vmatpush1.msra.mxu0 %v211
    %243 = vmatprep.subr.mxu0 0.0
    %244 = vmatpush1.msra.mxu0 %v212
    %245 = vmatprep.subr.mxu0 0.0
    %246 = vmatpush1.msra.mxu0 %v213
    %247 = vmatprep.subr.mxu0 0.0
    %248 = vmatpush1.msra.mxu0 %v214
    %249 = vmatprep.subr.mxu0 0.0
    %250 = vmatpush1.msra.mxu0 %v215
    %251 = vmatprep.subr.mxu0 0.0
    %252 = vmatpush1.msra.mxu0 %v216
    %253 = vmatprep.subr.mxu0 0.0
    %254 = vmatpush1.msra.mxu0 %v217
    %255 = vmatprep.subr.mxu0 0.0
    %256 = vmatpush1.msra.mxu0 %v218
    %257 = vmatprep.subr.mxu0 0.0
    %258 = vmatpush1.msra.mxu0 %v219
    %259 = vmatprep.subr.mxu0 0.0
    %260 = vmatpush1.msra.mxu0 0.0
    %261 = vmatprep.subr.mxu0 0.0
    %262 = vmatpush1.msra.mxu0 0.0
    %263 = vmatprep.subr.mxu0 0.0
    %264 = vmatpush1.msra.mxu0 0.0
    %265 = vmatprep.subr.mxu0 0.0
    %266 = vmatpush1.msra.mxu0 0.0
    %267 = vmatprep.subr.mxu0 0.0
    %268 = vmatpush1.msra.mxu0 0.0
    %269 = vmatprep.subr.mxu0 0.0
    %270 = vmatpush1.msra.mxu0 0.0
    %271 = vmatprep.subr.mxu0 0.0
    %272 = vmatpush1.msra.mxu0 0.0
    %273 = vmatprep.subr.mxu0 0.0
    %274 = vmatpush1.msra.mxu0 0.0
    %275 = vmatprep.subr.mxu0 0.0
    %276 = vmatpush1.msra.mxu0 0.0
    %277 = vmatprep.subr.mxu0 0.0
    %278 = vmatpush1.msra.mxu0 0.0
    %279 = vmatprep.subr.mxu0 0.0
    %280 = vmatpush1.msra.mxu0 0.0
    %281 = vmatprep.subr.mxu0 0.0
    %282 = vmatpush1.msra.mxu0 0.0
    %283 = vmatprep.subr.mxu0 0.0
    %284 = vmatpush1.msra.mxu0 0.0
    %285 = vmatprep.subr.mxu0 0.0
    %286 = vmatpush1.msra.mxu0 0.0
    %287 = vmatprep.subr.mxu0 0.0
    %288 = vmatpush1.msra.mxu0 0.0
    %289 = vmatprep.subr.mxu0 0.0
    %290 = vmatpush1.msra.mxu0 0.0
    %291 = vmatprep.mubr.f32.mxu0 0.0
    %292 = vmatmul.mubr.f32.gmra.mrb[0].mxu0 %v203
    %v293 = vpop.f32.mrb[0].mxu0
    %v294 = vadd.f32 %v225, %v293
    %v295 = vpop.f32.mrb[0].mxu0
    %296 = vdwg.mxu0
    %v297 = vmax.f32 %v294, 0.0
    %v298 = vld [vmem:[%s6] sm:$0xff]
    %v299 = vld [vmem:[%s6 + $0x8] sm:$0xff]
    %v300 = vld [vmem:[%s6 + $0x10] sm:$0xff]
    %v301 = vld [vmem:[%s6 + $0x18] sm:$0xff]
    %v302 = vld [vmem:[%s6 + $0x20] sm:$0xff]
    %v303 = vld [vmem:[%s6 + $0x28] sm:$0xff]
    %v304 = vld [vmem:[%s6 + $0x30] sm:$0xff]
    %v305 = vld [vmem:[%s6 + $0x38] sm:$0xff]
    %v306 = vld [vmem:[%s6 + $0x40] sm:$0xff]
    %v307 = vld [vmem:[%s6 + $0x48] sm:$0xff]
    %v308 = vld [vmem:[%s6 + $0x50] sm:$0xff]
    %v309 = vld [vmem:[%s6 + $0x58] sm:$0xff]
    %v310 = vld [vmem:[%s6 + $0x60] sm:$0xff]
    %v311 = vld [vmem:[%s6 + $0x68] sm:$0xff]
    %v312 = vld [vmem:[%s6 + $0x70] sm:$0xff]
    %v313 = vld [vmem:[%s6 + $0x78] sm:$0xff]
    %v314 = vld [vmem:[%s7] sm:$0x1]
    %v316 = vlaneseq
    %v317 = vshrl.u32 %v316, 7
    %v318 = vsub.s32 0, %v317
    %v319 = vrot.slane %v314, %v318
    %321 = vmatprep.subr.mxu0 0.0
    %322 = vmatpush1.msra.mxu0 %v298
    %323 = vmatprep.subr.mxu0 0.0
    %324 = vmatpush1.msra.mxu0 %v299
    %325 = vmatprep.subr.mxu0 0.0
    %326 = vmatpush1.msra.mxu0 %v300
    %327 = vmatprep.subr.mxu0 0.0
    %328 = vmatpush1.msra.mxu0 %v301
    %329 = vmatprep.subr.mxu0 0.0
    %330 = vmatpush1.msra.mxu0 %v302
    %331 = vmatprep.subr.mxu0 0.0
    %332 = vmatpush1.msra.mxu0 %v303
    %333 = vmatprep.subr.mxu0 0.0
    %334 = vmatpush1.msra.mxu0 %v304
    %335 = vmatprep.subr.mxu0 0.0
    %336 = vmatpush1.msra.mxu0 %v305
    %337 = vmatprep.subr.mxu0 0.0
    %338 = vmatpush1.msra.mxu0 %v306
    %339 = vmatprep.subr.mxu0 0.0
    %340 = vmatpush1.msra.mxu0 %v307
    %341 = vmatprep.subr.mxu0 0.0
    %342 = vmatpush1.msra.mxu0 %v308
    %343 = vmatprep.subr.mxu0 0.0
    %344 = vmatpush1.msra.mxu0 %v309
    %345 = vmatprep.subr.mxu0 0.0
    %346 = vmatpush1.msra.mxu0 %v310
    %347 = vmatprep.subr.mxu0 0.0
    %348 = vmatpush1.msra.mxu0 %v311
    %349 = vmatprep.subr.mxu0 0.0
    %350 = vmatpush1.msra.mxu0 %v312
    %351 = vmatprep.subr.mxu0 0.0
    %352 = vmatpush1.msra.mxu0 %v313
    %353 = vmatprep.subr.mxu0 0.0
    %354 = vmatpush1.msra.mxu0 0.0
    %355 = vmatprep.subr.mxu0 0.0
    %356 = vmatpush1.msra.mxu0 0.0
    %357 = vmatprep.subr.mxu0 0.0
    %358 = vmatpush1.msra.mxu0 0.0
    %359 = vmatprep.subr.mxu0 0.0
    %360 = vmatpush1.msra.mxu0 0.0
    %361 = vmatprep.subr.mxu0 0.0
    %362 = vmatpush1.msra.mxu0 0.0
    %363 = vmatprep.subr.mxu0 0.0
    %364 = vmatpush1.msra.mxu0 0.0
    %365 = vmatprep.subr.mxu0 0.0
    %366 = vmatpush1.msra.mxu0 0.0
    %367 = vmatprep.subr.mxu0 0.0
    %368 = vmatpush1.msra.mxu0 0.0
    %369 = vmatprep.subr.mxu0 0.0
    %370 = vmatpush1.msra.mxu0 0.0
    %371 = vmatprep.subr.mxu0 0.0
    %372 = vmatpush1.msra.mxu0 0.0
    %373 = vmatprep.subr.mxu0 0.0
    %374 = vmatpush1.msra.mxu0 0.0
    %375 = vmatprep.subr.mxu0 0.0
    %376 = vmatpush1.msra.mxu0 0.0
    %377 = vmatprep.subr.mxu0 0.0
    %378 = vmatpush1.msra.mxu0 0.0
    %379 = vmatprep.subr.mxu0 0.0
    %380 = vmatpush1.msra.mxu0 0.0
    %381 = vmatprep.subr.mxu0 0.0
    %382 = vmatpush1.msra.mxu0 0.0
    %383 = vmatprep.subr.mxu0 0.0
    %384 = vmatpush1.msra.mxu0 0.0
    %385 = vmatprep.mubr.f32.mxu0 0.0
    %386 = vmatmul.mubr.f32.gmra.mrb[0].mxu0 %v297
    %v387 = vpop.f32.mrb[0].mxu0
    %v388 = vadd.f32 %v319, %v387
    %v389 = vpop.f32.mrb[0].mxu0
    %390 = vdwg.mxu0
    %391 = vst.msk [vmem:[#allocation5] sm:$0xff] %vm53, %v388
    // Predicated region
    $region38: #{_mlp_pallas_onehot.1} parent=1 // pred_check
      _
    $region39: #{_mlp_pallas_onehot.1} parent=1 // pred_check_branch
      %393 = sbr.rel (0) target = $region41
    $region40: #{_mlp_pallas_onehot.1} parent=1 // pred_region
      %s395 = ssub.s32 128, 128
      %396 = vsyncadd [#allocation4], %s395
      %s398 = sshll.u32 [#allocation5], 4
      %s399 = int_to_ptr.vmem [resolvable:$true] %s398
      %401 = dma.vmem_to_hbm [thread:$0]  %s399, 128, %s8, [#allocation4]
    $region41: #{_mlp_pallas_onehot.1} parent=1 // pred_fallthru
      _
    // Predicated region
    $region42: #{_mlp_pallas_onehot.1} parent=1 // pred_check
      _
    $region43: #{_mlp_pallas_onehot.1} parent=1 // pred_check_branch
      %403 = sbr.rel (0) target = $region45
    $region44: #{_mlp_pallas_onehot.1} parent=1 // pred_region
      %404 = dma.done [#allocation4], 128
    $region45: #{_mlp_pallas_onehot.1} parent=1 // pred_fallthru
      _
    %405 = vsyncpa [#allocation3], 1
    %406 = vsyncpa [#allocation4], 1

</llo_original>
